<compile_context>
chip_gen: v5e
topology: v5e:2x2
jax: 0.10.0
libtpu: 0.0.40
codegen_flags: <defaults>
</compile_context>

<pallas_src>
import math

import jax
import jax.numpy as jnp
from jax.experimental import pallas as pl
from jax.experimental.pallas import tpu as pltpu

_MAX_F_TILE = 127            # features-per-tile cap: F_tile + phase row <= 128 (one MXU chunk)
_EXPAND_BYTES_CAP = 2 << 20  # cap on the block-diagonal expand table held in VMEM


def _round_up(n: int, m: int) -> int:
    return ((n + m - 1) // m) * m


def _round_down(n: int, m: int) -> int:
    return (n // m) * m


def _periodic_flat_kernel(x_ref, expand_ref, out_ref):
    """One (tile_b, Wt) slab of the flattened periodic embedding.

    x_ref:      (tile_b, Xc)   f32  -- features for this tile (+ ones column [+ zero pad])
    expand_ref: (1, Xc, Wt)    f32  -- block-diagonal 2*pi*freq columns; last real row = phase
    out_ref:    (tile_b, Wt)   out  -- lane-dense flat output block
    """
    # MXU expands features to (feature, frequency) columns and adds the +pi/2 phase on the
    # cos columns (via the ones column of x), landing directly in the flat output layout.
    v = jnp.dot(
        x_ref[...],
        expand_ref[0],
        preferred_element_type=jnp.float32,
        precision=jax.lax.Precision.HIGHEST,  # keep f32 accuracy for the phase argument
    )
    # cos(t) == sin(t + pi/2): one EUP pass covers both halves, then one dense slab store.
    out_ref[...] = jnp.sin(v).astype(out_ref.dtype)


def periodic_embeddings(
    x: jax.Array,
    frequencies: jax.Array,
    *,
    target_block_bytes: int = 4 << 20,
    out_dtype=jnp.float32,
):
    """Pallas implementation of PeriodicEmbeddings.forward.

    x:            (B, F) float32
    frequencies:  (F, K) float32
    returns:      (B, F, 2K) == concat([cos(2*pi*f*x), sin(2*pi*f*x)], -1)
    """
    assert x.ndim == 2
    B, F = x.shape
    F2, K = frequencies.shape
    assert F == F2 and B >= 1 and F >= 1 and K >= 1
    twoK = 2 * K
    C = F * twoK
    two_pi = 2.0 * math.pi

    x = x.astype(jnp.float32)
    freqs = frequencies.astype(jnp.float32)

    # Large F (or large dense table) -> tile the feature axis in the grid instead.
    use_tiled = (F > _MAX_F_TILE) or ((F + 1) * C * 4 > _EXPAND_BYTES_CAP)

    if not use_tiled:
        # ---------------- folded path: single feature tile, fold g batch rows per output row
        g = 1
        if C % 128 != 0:
            g_base = 128 // math.gcd(C, 128)
            if B % g_base == 0 and (g_base * F + 1) * (g_base * C) * 4 <= _EXPAND_BYTES_CAP:
                g = g_base
        # Widen toward ~512-lane rows when divisibility / table size allow.
        while ((g * C) % 128 == 0 and g * C < 512 and B % (2 * g) == 0
               and B // (2 * g) >= 8
               and (2 * g * F + 1) * (2 * g * C) * 4 <= _EXPAND_BYTES_CAP):
            g *= 2

        R = B // g
        Xc = g * F + 1          # g groups of F features + 1 ones column (phase bias)
        Wt = g * C              # flat output width (full lane extent of the output array)
        n_ft = 1

        freq2 = jnp.concatenate([freqs, freqs], axis=-1) * two_pi            # (F, 2K)
        blk = (jnp.eye(F, dtype=jnp.float32)[:, :, None] * freq2[None]).reshape(F, C)
        if g > 1:
            blk = (jnp.eye(g, dtype=jnp.float32)[:, None, :, None]
                   * blk[None, :, None, :]).reshape(g * F, g * C)
        phase = jnp.tile(
            jnp.concatenate([jnp.full((F, K), 0.5 * math.pi, jnp.float32),
                             jnp.zeros((F, K), jnp.float32)], axis=-1).reshape(1, C),
            (1, g))
        expand = jnp.concatenate([blk, phase], axis=0)[None]                 # (1, Xc, Wt)

        x_aug = jnp.concatenate(
            [x.reshape(R, g * F), jnp.ones((R, 1), jnp.float32)], axis=-1)   # (R, Xc)
        out_flat_shape = (R, Wt)
    else:
        # ---------------- feature-tiled path: grid over (batch tiles, feature tiles)
        step = 64 // math.gcd(K, 64)            # smallest F_tile with (F_tile*2K) % 128 == 0
        Ft = max(step, _round_down(min(_MAX_F_TILE, max(step, 4096 // twoK)), step))
        n_ft = pl.cdiv(F, Ft)
        F_pad = n_ft * Ft
        Xc = 128                                # Ft features + ones column + zero padding
        Wt = Ft * twoK                          # lane width per feature tile (multiple of 128)

        freq_p = jnp.pad(freqs, ((0, F_pad - F), (0, 0)))
        freq2_t = (jnp.concatenate([freq_p, freq_p], axis=-1) * two_pi).reshape(n_ft, Ft, twoK)
        blk = (jnp.eye(Ft, dtype=jnp.float32)[None, :, :, None]
               * freq2_t[:, :, None, :]).reshape(n_ft, Ft, Wt)
        phase = jnp.broadcast_to(
            jnp.concatenate([jnp.full((Ft, K), 0.5 * math.pi, jnp.float32),
                             jnp.zeros((Ft, K), jnp.float32)], axis=-1).reshape(1, 1, Wt),
            (n_ft, 1, Wt))
        zero_rows = jnp.zeros((n_ft, Xc - Ft - 1, Wt), jnp.float32)
        expand = jnp.concatenate([blk, phase, zero_rows], axis=1)            # (n_ft, Xc, Wt)

        xp = jnp.pad(x, ((0, 0), (0, F_pad - F))).reshape(B, n_ft, Ft)
        x_aug = jnp.concatenate(
            [xp, jnp.ones((B, n_ft, 1), jnp.float32),
             jnp.zeros((B, n_ft, Xc - Ft - 1), jnp.float32)],
            axis=-1).reshape(B, n_ft * Xc)
        R = B
        out_flat_shape = (B, C)

    # ---------------- batch tiling: ~target_block_bytes output blocks, partial last block masked
    if R <= 8:
        tile_b = R
    else:
        rows = max(8, _round_down(target_block_bytes // (Wt * 4), 8))
        tile_b = min(rows, _round_down(R, 8))
        if pl.cdiv(R, tile_b) < 4:  # give the pipeline (and dual-TC parts) a few steps
            tile_b = max(8, min(tile_b, _round_up(pl.cdiv(R, 4), 8)))
    n_bt = pl.cdiv(R, tile_b)

    # Double-buffered block residency; pass an explicit budget (>= 32 MiB scoped default,
    # <= v7x's 64 MiB physical per TensorCore).
    need = 2 * 4 * (tile_b * Xc + tile_b * Wt + Xc * Wt)
    vmem_limit = int(min(max(32 << 20, 2 * need), 64 << 20))

    out_flat = pl.pallas_call(
        _periodic_flat_kernel,
        out_shape=jax.ShapeDtypeStruct(out_flat_shape, out_dtype),
        grid_spec=pltpu.PrefetchScalarGridSpec(
            num_scalar_prefetch=0,
            grid=(n_bt, n_ft),
            in_specs=[
                pl.BlockSpec((tile_b, Xc), lambda i, j: (i, j)),      # x rows / feature tile
                pl.BlockSpec((1, Xc, Wt), lambda i, j: (j, 0, 0)),    # expand table for tile j
            ],
            out_specs=pl.BlockSpec((tile_b, Wt), lambda i, j: (i, j)),
        ),
        compiler_params=pltpu.CompilerParams(
            dimension_semantics=("parallel", "parallel"),  # all tiles independent
            vmem_limit_bytes=vmem_limit,
        ),
    )(x_aug, expand)

    # Row-major flat layout -> (B, F, 2K) is a free (metadata) reshape.
    return out_flat.reshape(B, F, twoK)


if __name__ == "__main__":
    def reference(x, freqs):
        v = 2.0 * math.pi * freqs[None] * x[..., None]
        return jnp.concatenate([jnp.cos(v), jnp.sin(v)], axis=-1)

    key = jax.random.PRNGKey(0)

    # (batch, n_features, n_frequencies, frequency_scale)
    configs = [
        (16, 4, 8, 0.1),     # primary: folded lane-dense path (g=2 -> 128-wide output rows)
        (15, 4, 8, 0.1),     # fallback: batch not divisible by fold factor; masked partial tile
        (12, 130, 2, 0.05),  # feature-tiled path: F > 127; partial feature + batch blocks
    ]
    for (batch, n_features, n_frequencies, frequency_scale) in configs:
        key, kx, kf = jax.random.split(key, 3)
        x = jax.random.normal(kx, (batch, n_features), dtype=jnp.float32)
        frequencies = frequency_scale * jax.random.normal(
            kf, (n_features, n_frequencies), dtype=jnp.float32)

        out = jax.block_until_ready(periodic_embeddings(x, frequencies))
        ref = reference(x, frequencies)
        assert out.shape == (batch, n_features, 2 * n_frequencies), out.shape
        assert jnp.allclose(out, ref, atol=1e-5, rtol=1e-5), (
            batch, n_features, n_frequencies, float(jnp.max(jnp.abs(out - ref))))

    print("KERNEL_OK")
</pallas_src>

<mosaic_0001>
module attributes {stable_mosaic.version = 11 : i64} {
  func.func @_periodic_flat_kernel(%arg0: i32, %arg1: i32, %arg2: memref<8x9xf32, #tpu.memory_space<vmem>>, %arg3: memref<1x9x128xf32, #tpu.memory_space<vmem>>, %arg4: memref<8x128xf32, #tpu.memory_space<vmem>>) attributes {dimension_semantics = [#tpu.dimension_semantics<parallel>, #tpu.dimension_semantics<parallel>], iteration_bounds = array<i64: 1, 1>, scalar_prefetch = 0 : i64, scratch_operands = 0 : i64, tpu.core_type = #tpu.core_type<tc>, window_params = [{transform_indices = @transform_0, window_bounds = array<i64: 8, 9>}, {transform_indices = @transform_1, window_bounds = array<i64: 1, 9, 128>}, {transform_indices = @transform_2, window_bounds = array<i64: 8, 128>}]} {
    %c0 = arith.constant 0 : index
    %c0_0 = arith.constant 0 : index
    %0 = vector.load %arg2[%c0, %c0_0] : memref<8x9xf32, #tpu.memory_space<vmem>>, vector<8x9xf32>
    %c0_1 = arith.constant 0 : index
    %c0_2 = arith.constant 0 : index
    %c0_3 = arith.constant 0 : index
    %1 = vector.load %arg3[%c0_1, %c0_2, %c0_3] : memref<1x9x128xf32, #tpu.memory_space<vmem>>, vector<1x9x128xf32>
    %2 = vector.shape_cast %1 : vector<1x9x128xf32> to vector<9x128xf32>
    %cst = arith.constant dense<0.000000e+00> : vector<8x128xf32>
    %3 = tpu.matmul %0, %2, %cst {dimension_numbers = #tpu.dot_dimension_numbers<[1], [0], [0], [1], [0, 0, 1, 1], [], []>, precision = #tpu.contract_precision<fp32>} : vector<8x9xf32>, vector<9x128xf32>, vector<8x128xf32> -> vector<8x128xf32>
    %4 = math.sin %3 : vector<8x128xf32>
    %c0_4 = arith.constant 0 : index
    %c0_5 = arith.constant 0 : index
    %5 = vector.load %arg4[%c0_4, %c0_5] : memref<8x128xf32, #tpu.memory_space<vmem>>, vector<8x128xf32>
    tpu.vector_store %arg4[%c0_4, %c0_5], %4 {strides = array<i32>} : memref<8x128xf32, #tpu.memory_space<vmem>>, vector<8x128xf32>,
    return
  }
  func.func @transform_0(%arg0: i32, %arg1: i32) -> (i32, i32) {
    %c0_i32 = arith.constant 0 : i32
    return %arg0, %arg1 : i32, i32
  }
  func.func @transform_1(%arg0: i32, %arg1: i32) -> (i32, i32, i32) {
    %c0_i32 = arith.constant 0 : i32
    %c0_i32_0 = arith.constant 0 : i32
    %c0_i32_1 = arith.constant 0 : i32
    return %arg1, %c0_i32, %c0_i32_0 : i32, i32, i32
  }
  func.func @transform_2(%arg0: i32, %arg1: i32) -> (i32, i32) {
    %c0_i32 = arith.constant 0 : i32
    return %arg0, %arg1 : i32, i32
  }
}

</mosaic_0001>

<llo_original>
// kernel: tpu_custom_call.1
$region0: #{tpu_custom_call.1}
  #allocation0 [shape = 'u32[]', space=smem, size = 0x4, offset = 0x4, fixed_abs, tag = 'smem constant byte address 0x4 - core index']
  #allocation1 [shape = 'u32[72,128]{1,0:T(1,128)}', space=vmem, size = 0x9000, scoped, tag = 'internal scratch']
  %s0 = inlined_call_operand.vmem [shape: f32[8,9], index: 0, kind: input, shape index: {}]
  %s1 = inlined_call_operand.vmem [shape: f32[1,9,128], index: 1, kind: input, shape index: {}]
  %s2 = inlined_call_operand.hbm [shape: f32[8,128], index: 2, kind: output, shape index: {}]
  %s3 = sld [smem:[#allocation0]]
  $region18: #{tpu_custom_call.1} parent=0
    _
  %s5 = ssub.s32 1, %s3
  %s6 = scalar_select 0, %s5, %s3
  $region1: #{tpu_custom_call.1} parent=0
    #allocation2 [shape = 'u8[4096]{0}', space=vmem, size = 0x1000, scoped, tag = 'output window, operand 0, single buffered']
    #allocation3 [shape = 's32[1]{0}', space=sflag, size = 0x4, scoped, tag = 'scoped memory for tpu_custom_call.1']
    %7 = vsyncpa [#allocation3], 0
    // Predicated region
    $region2: #{tpu_custom_call.1} parent=1 // pred_check
      _
    $region3: #{tpu_custom_call.1} parent=1 // pred_check_branch
      %9 = sbr.rel (0) target = $region5
    $region4: #{tpu_custom_call.1} parent=1 // pred_region
      _
    $region5: #{tpu_custom_call.1} parent=1 // pred_fallthru
      _
    // Predicated region
    $region6: #{tpu_custom_call.1} parent=1 // pred_check
      _
    $region7: #{tpu_custom_call.1} parent=1 // pred_check_branch
      %11 = sbr.rel (0) target = $region9
    $region8: #{tpu_custom_call.1} parent=1 // pred_region
      _
    $region9: #{tpu_custom_call.1} parent=1 // pred_fallthru
      _
    %v12 = vld [vmem:[%s0] sm:$0xff]
    %v13 = vld [vmem:[%s1] sm:$0xff]
    %v14 = vld [vmem:[%s1 + $0x8] sm:$0x1]
    %vm15 = vcmask 72704
    %v17 = vsel %vm15, %v12, 0
    %vm19 = vcmask 1040384
    %v21 = vsel %vm19, %v14, 0
    %23 = vmatpush.msra.mxu0 0.0
    %24 = vmatpush.msra.mxu0 0.0
    %25 = vmatpush.msra.mxu0 0.0
    %26 = vmatpush.msra.mxu0 0.0
    %27 = vmatpush.msra.mxu0 0.0
    %28 = vmatpush.msra.mxu0 0.0
    %29 = vmatpush.msra.mxu0 0.0
    %30 = vmatpush.msra.mxu0 0.0
    %31 = vmatpush.msra.mxu0 0.0
    %32 = vmatpush.msra.mxu0 0.0
    %33 = vmatpush.msra.mxu0 0.0
    %34 = vmatpush.msra.mxu0 0.0
    %35 = vmatpush.msra.mxu0 0.0
    %36 = vmatpush.msra.mxu0 0.0
    %v37 = vand.u32 %v21, 4294901760
    %38 = vmatpush.msra.mxu0 %v37
    %v39 = vand.u32 %v13, 4294901760
    %40 = vmatpush.msra.mxu0 %v39
    %v41 = vand.u32 %v17, 4294901760
    %v42 = vsub.f32 %v17, %v41
    %v43 = vand.u32 %v42, 4294901760
    %v44 = vsub.f32 %v42, %v43
    %v45 = vand.u32 %v44, 4294901760
    %46 = vmatmul.f32.gmra.mxu0 %v45
    %v47 = vpop.f32.mrf.mxu0
    %v48 = vadd.f32 0.0, %v47
    %49 = vdwg.mxu0
    %50 = vmatpush.msra.mxu0 0.0
    %51 = vmatpush.msra.mxu0 0.0
    %52 = vmatpush.msra.mxu0 0.0
    %53 = vmatpush.msra.mxu0 0.0
    %54 = vmatpush.msra.mxu0 0.0
    %55 = vmatpush.msra.mxu0 0.0
    %56 = vmatpush.msra.mxu0 0.0
    %57 = vmatpush.msra.mxu0 0.0
    %58 = vmatpush.msra.mxu0 0.0
    %59 = vmatpush.msra.mxu0 0.0
    %60 = vmatpush.msra.mxu0 0.0
    %61 = vmatpush.msra.mxu0 0.0
    %62 = vmatpush.msra.mxu0 0.0
    %63 = vmatpush.msra.mxu0 0.0
    %v64 = vand.u32 %v21, 4294901760
    %v65 = vsub.f32 %v21, %v64
    %v66 = vand.u32 %v65, 4294901760
    %v67 = vsub.f32 %v65, %v66
    %v68 = vand.u32 %v67, 4294901760
    %69 = vmatpush.msra.mxu0 %v68
    %v70 = vand.u32 %v13, 4294901760
    %v71 = vsub.f32 %v13, %v70
    %v72 = vand.u32 %v71, 4294901760
    %v73 = vsub.f32 %v71, %v72
    %v74 = vand.u32 %v73, 4294901760
    %75 = vmatpush.msra.mxu0 %v74
    %v76 = vand.u32 %v17, 4294901760
    %77 = vmatmul.f32.gmra.mxu0 %v76
    %v78 = vpop.f32.mrf.mxu0
    %v79 = vadd.f32 %v48, %v78
    %80 = vdwg.mxu0
    %81 = vmatpush.msra.mxu0 0.0
    %82 = vmatpush.msra.mxu0 0.0
    %83 = vmatpush.msra.mxu0 0.0
    %84 = vmatpush.msra.mxu0 0.0
    %85 = vmatpush.msra.mxu0 0.0
    %86 = vmatpush.msra.mxu0 0.0
    %87 = vmatpush.msra.mxu0 0.0
    %88 = vmatpush.msra.mxu0 0.0
    %89 = vmatpush.msra.mxu0 0.0
    %90 = vmatpush.msra.mxu0 0.0
    %91 = vmatpush.msra.mxu0 0.0
    %92 = vmatpush.msra.mxu0 0.0
    %93 = vmatpush.msra.mxu0 0.0
    %94 = vmatpush.msra.mxu0 0.0
    %v95 = vand.u32 %v21, 4294901760
    %v96 = vsub.f32 %v21, %v95
    %97 = vmatpush.msra.mxu0 %v96
    %v98 = vand.u32 %v13, 4294901760
    %v99 = vsub.f32 %v13, %v98
    %100 = vmatpush.msra.mxu0 %v99
    %v101 = vand.u32 %v17, 4294901760
    %v102 = vsub.f32 %v17, %v101
    %103 = vmatmul.f32.gmra.mxu0 %v102
    %v104 = vpop.f32.mrf.mxu0
    %v105 = vadd.f32 %v79, %v104
    %106 = vdwg.mxu0
    %107 = vmatpush.msra.mxu0 0.0
    %108 = vmatpush.msra.mxu0 0.0
    %109 = vmatpush.msra.mxu0 0.0
    %110 = vmatpush.msra.mxu0 0.0
    %111 = vmatpush.msra.mxu0 0.0
    %112 = vmatpush.msra.mxu0 0.0
    %113 = vmatpush.msra.mxu0 0.0
    %114 = vmatpush.msra.mxu0 0.0
    %115 = vmatpush.msra.mxu0 0.0
    %116 = vmatpush.msra.mxu0 0.0
    %117 = vmatpush.msra.mxu0 0.0
    %118 = vmatpush.msra.mxu0 0.0
    %119 = vmatpush.msra.mxu0 0.0
    %120 = vmatpush.msra.mxu0 0.0
    %v121 = vand.u32 %v21, 4294901760
    %122 = vmatpush.msra.mxu0 %v121
    %v123 = vand.u32 %v13, 4294901760
    %124 = vmatpush.msra.mxu0 %v123
    %v125 = vand.u32 %v17, 4294901760
    %v126 = vsub.f32 %v17, %v125
    %v127 = vand.u32 %v126, 4294901760
    %128 = vmatmul.f32.gmra.mxu0 %v127
    %v129 = vpop.f32.mrf.mxu0
    %v130 = vadd.f32 %v105, %v129
    %131 = vdwg.mxu0
    %132 = vmatpush.msra.mxu0 0.0
    %133 = vmatpush.msra.mxu0 0.0
    %134 = vmatpush.msra.mxu0 0.0
    %135 = vmatpush.msra.mxu0 0.0
    %136 = vmatpush.msra.mxu0 0.0
    %137 = vmatpush.msra.mxu0 0.0
    %138 = vmatpush.msra.mxu0 0.0
    %139 = vmatpush.msra.mxu0 0.0
    %140 = vmatpush.msra.mxu0 0.0
    %141 = vmatpush.msra.mxu0 0.0
    %142 = vmatpush.msra.mxu0 0.0
    %143 = vmatpush.msra.mxu0 0.0
    %144 = vmatpush.msra.mxu0 0.0
    %145 = vmatpush.msra.mxu0 0.0
    %v146 = vand.u32 %v21, 4294901760
    %v147 = vsub.f32 %v21, %v146
    %v148 = vand.u32 %v147, 4294901760
    %149 = vmatpush.msra.mxu0 %v148
    %v150 = vand.u32 %v13, 4294901760
    %v151 = vsub.f32 %v13, %v150
    %v152 = vand.u32 %v151, 4294901760
    %153 = vmatpush.msra.mxu0 %v152
    %v154 = vand.u32 %v17, 4294901760
    %155 = vmatmul.f32.gmra.mxu0 %v154
    %v156 = vpop.f32.mrf.mxu0
    %v157 = vadd.f32 %v130, %v156
    %158 = vdwg.mxu0
    %159 = vmatpush.msra.mxu0 0.0
    %160 = vmatpush.msra.mxu0 0.0
    %161 = vmatpush.msra.mxu0 0.0
    %162 = vmatpush.msra.mxu0 0.0
    %163 = vmatpush.msra.mxu0 0.0
    %164 = vmatpush.msra.mxu0 0.0
    %165 = vmatpush.msra.mxu0 0.0
    %166 = vmatpush.msra.mxu0 0.0
    %167 = vmatpush.msra.mxu0 0.0
    %168 = vmatpush.msra.mxu0 0.0
    %169 = vmatpush.msra.mxu0 0.0
    %170 = vmatpush.msra.mxu0 0.0
    %171 = vmatpush.msra.mxu0 0.0
    %172 = vmatpush.msra.mxu0 0.0
    %v173 = vand.u32 %v21, 4294901760
    %174 = vmatpush.msra.mxu0 %v173
    %v175 = vand.u32 %v13, 4294901760
    %176 = vmatpush.msra.mxu0 %v175
    %v177 = vand.u32 %v17, 4294901760
    %178 = vmatmul.f32.gmra.mxu0 %v177
    %v179 = vpop.f32.mrf.mxu0
    %v180 = vadd.f32 %v157, %v179
    %181 = vdwg.mxu0
    %v182 = vand.u32 2147483647, %v180
    %vm183 = vcmp.le.f32.partialorder %v182, 0.7853982
    %vm184 = vcmp.lt.s32.totalorder %v180, 0
    %v185 = vand.u32 %v180, 2139095040
    %v186 = vshrl.u32 %v185, 23
    %v187 = vsub.s32 %v186, 127
    %v188 = vand.u32 2147483647, %v180
    %v189 = vand.u32 %v188, 8388607
    %v190 = vor.u32 %v189, 8388608
    %v191 = vsub.s32 0, %v190
    %v192 = vadd.s32 %v187, 1
    %vm193 = vcmp.gt.s32.totalorder %v192, 0
    %v194 = vsel %vm193, %v192, 0
    %v195 = vshrl.u32 %v194, 5
    %v196 = vand.u32 %v194, 31
    %v197 = vsub.s32 32, %v196
    %v198 = vshrl.u32 683565275, %v197
    %v199 = vshll.u32 683565275, %v196
    %v200 = vshrl.u32 2475754826, %v197
    %v201 = vor.u32 %v199, %v200
    %v202 = vshll.u32 2475754826, %v196
    %v203 = vshrl.u32 2131351028, %v197
    %v204 = vor.u32 %v202, %v203
    %v205 = vshll.u32 2131351028, %v196
    %v206 = vshrl.u32 2102212464, %v197
    %v207 = vor.u32 %v205, %v206
    %v208 = vshll.u32 2102212464, %v196
    %v209 = vshrl.u32 920167782, %v197
    %v210 = vor.u32 %v208, %v209
    %v211 = vshll.u32 920167782, %v196
    %v212 = vshrl.u32 1326507024, %v197
    %v213 = vor.u32 %v211, %v212
    %vm214 = vcmp.lt.s32.totalorder %v195, 1
    %vm215 = vcmp.lt.s32.totalorder %v195, 2
    %vm216 = vcmp.lt.s32.totalorder %v195, 3
    %vm217 = vcmp.lt.s32.totalorder %v195, 4
    %v218 = vsel %vm214, %v198, %v201
    %v219 = vsel %vm217, %v207, 2102212464
    %v220 = vsel %vm216, %v204, %v219
    %v221 = vsel %vm215, %v218, %v220
    %v222 = vsel %vm214, %v201, %v204
    %v223 = vsel %vm217, %v210, 920167782
    %v224 = vsel %vm216, %v207, %v223
    %v225 = vsel %vm215, %v222, %v224
    %v226 = vsel %vm214, %v204, %v207
    %v227 = vsel %vm217, %v213, 1326507024
    %v228 = vsel %vm216, %v210, %v227
    %v229 = vsel %vm215, %v226, %v228
    %v230 = vshll.u32 %v190, 8
    %v231 = vand.u32 %v230, 65535
    %v232 = vshrl.u32 %v230, 16
    %v233 = vand.u32 %v229, 65535
    %v234 = vshrl.u32 %v229, 16
    %v235 = vmul.u32 %v231, %v233
    %v236 = vmul.u32 %v231, %v234
    %v237 = vmul.u32 %v232, %v233
    %v238 = vmul.u32 %v232, %v234
    %v239 = vshll.u32 %v236, 16
    %v240 = vshrl.u32 %v236, 16
    %v241 = vshll.u32 %v237, 16
    %v242 = vshrl.u32 %v237, 16
    %vm243 = vc.u32 %v235, %v239
    %v244 = vsel %vm243, 1, 0
    %v245 = vadd.s32 %v235, %v239
    %v246 = vadd.s32 %v238, %v244
    %vm247 = vc.u32 %v245, %v241
    %v248 = vsel %vm247, 1, 0
    %v249 = vadd.s32 %v245, %v241
    %v250 = vadd.s32 %v246, %v248
    %v251 = vadd.s32 %v250, %v240
    %v252 = vadd.s32 %v251, %v242
    %v253 = vand.u32 %v230, 65535
    %v254 = vshrl.u32 %v230, 16
    %v255 = vand.u32 %v225, 65535
    %v256 = vshrl.u32 %v225, 16
    %v257 = vmul.u32 %v253, %v255
    %v258 = vmul.u32 %v253, %v256
    %v259 = vmul.u32 %v254, %v255
    %v260 = vmul.u32 %v254, %v256
    %v261 = vshll.u32 %v258, 16
    %v262 = vshrl.u32 %v258, 16
    %v263 = vshll.u32 %v259, 16
    %v264 = vshrl.u32 %v259, 16
    %vm265 = vc.u32 %v257, %v261
    %v266 = vsel %vm265, 1, 0
    %v267 = vadd.s32 %v257, %v261
    %v268 = vadd.s32 %v260, %v266
    %vm269 = vc.u32 %v267, %v263
    %v270 = vsel %vm269, 1, 0
    %v271 = vadd.s32 %v267, %v263
    %v272 = vadd.s32 %v268, %v270
    %v273 = vadd.s32 %v272, %v262
    %v274 = vadd.s32 %v273, %v264
    %v275 = vmul.u32 %v230, %v221
    %v276 = vadd.s32 %v252, %v271
    %vm277 = vc.u32 %v252, %v271
    %v278 = vadd.s32 %v274, 1
    %v279 = vsel %vm277, %v278, %v274
    %v280 = vadd.s32 %v275, %v279
    %v281 = vadd.s32 %v280, 536870912
    %v282 = vshrl.u32 %v281, 30
    %v283 = vshll.u32 %v282, 30
    %v284 = vsub.s32 %v280, %v283
    %vm285 = vcmp.lt.s32.totalorder %v284, 0
    %v286 = vsub.s32 0, %v284
    %v287 = vsel %vm285, %v286, %v284
    %v288 = vclz %v287
    %v289 = vsub.s32 %v288, 2
    %vm290 = vcmp.gt.s32.totalorder 0, %v289
    %v291 = vsel %vm290, 0, %v289
    %v292 = vsub.s32 32, %v291
    %v293 = vshll.u32 %v284, %v291
    %v294 = vshrl.u32 %v276, %v292
    %v295 = vor.u32 %v293, %v294
    %v296 = vsub.s32 4294967266, %v291
    %v297 = vadd.s32 %v296, 127
    %v298 = vshll.u32 %v297, 23
    %v299 = vor.u32 4788187, %v298
    %v300 = vand.u32 2147483647, %v299
    %v302 = vcvt.s32.f32 %v295
    %v303 = vmul.f32 %v302, %v300
    %v304 = vxor.u32 %v303, 2147483648
    %v305 = vsel %vm184, %v304, %v303
    %v306 = vsub.s32 4, %v282
    %v307 = vsel %vm184, %v306, %v282
    %v308 = vsel %vm183, %v180, %v305
    %v309 = vsel %vm183, 0, %v307
    %v310 = vmul.f32 %v308, %v308
    %v311 = vmul.f32 %v310, -0.001358992
    %v312 = vadd.f32 %v311, 0.041655596
    %v313 = vmul.f32 %v310, %v312
    %v314 = vadd.f32 %v313, -0.4999988
    %v315 = vmul.f32 %v310, %v314
    %v316 = vadd.f32 1.0, %v315
    %v317 = vmul.f32 %v308, %v308
    %v318 = vmul.f32 %v317, -0.00019511016
    %v319 = vadd.f32 %v318, 0.008332121
    %v320 = vmul.f32 %v317, %v319
    %v321 = vadd.f32 %v320, -0.16666654
    %v322 = vmul.f32 %v317, %v321
    %v323 = vadd.f32 %v322, 1.0
    %v324 = vmul.f32 %v323, %v308
    %vm325 = vweird.f32 %v180
    %v326 = vadd.s32 %v309, 3
    %v327 = vand.u32 %v326, 3
    %vm328 = vcmp.lt.s32.totalorder %v327, 2
    %vm329 = vcmp.eq.s32.totalorder %v327, 0
    %v330 = vxor.u32 %v324, 2147483648
    %v331 = vsel %vm329, %v316, %v330
    %vm332 = vcmp.eq.s32.totalorder %v327, 2
    %v333 = vxor.u32 %v316, 2147483648
    %v334 = vsel %vm332, %v333, %v324
    %v335 = vsel %vm328, %v331, %v334
    %v336 = vsel %vm325, nan, %v335
    %337 = vst [vmem:[#allocation2] sm:$0xff] %v336
    // Predicated region
    $region10: #{tpu_custom_call.1} parent=1 // pred_check
      _
    $region11: #{tpu_custom_call.1} parent=1 // pred_check_branch
      %339 = sbr.rel (0) target = $region13
    $region12: #{tpu_custom_call.1} parent=1 // pred_region
      %341 = vsyncadd [#allocation3], 0
      %s343 = sshll.u32 [#allocation2], 4
      %s344 = int_to_ptr.vmem [resolvable:$true] %s343
      %s345 = sshll.u32 %s2, 4
      %s346 = int_to_ptr.hbm [resolvable:$true] %s345
      %348 = dma.vmem_to_hbm [thread:$0]  %s344, 128, %s346, [#allocation3]
    $region13: #{tpu_custom_call.1} parent=1 // pred_fallthru
      _
    // Predicated region
    $region14: #{tpu_custom_call.1} parent=1 // pred_check
      _
    $region15: #{tpu_custom_call.1} parent=1 // pred_check_branch
      %350 = sbr.rel (0) target = $region17
    $region16: #{tpu_custom_call.1} parent=1 // pred_region
      %352 = dma.done [#allocation3], 128
    $region17: #{tpu_custom_call.1} parent=1 // pred_fallthru
      _
    %353 = vsyncpa [#allocation3], 1

</llo_original>
